<compile_context>
chip_gen: v6e
topology: v6e:2x2x1
jax: 0.10.0
libtpu: 0.0.40
codegen_flags: <defaults>
</compile_context>

<pallas_src>
import jax
import jax.numpy as jnp
from jax import lax
from jax.experimental import pallas as pl
from jax.experimental.pallas import tpu as pltpu

NEG_SLOPE = 0.01  # PyTorch nn.LeakyReLU default


def _round_up(n, m):
    return -(-n // m) * m


def _bias_leaky(acc_f32, bias_f32, act_dtype):
    # Bias add in f32 (accumulator dtype), single cast to the epilogue dtype,
    # LeakyReLU as max(h, slope*h) (equivalent to where(h>0,h,slope*h) for
    # slope < 1) -> the result is already in the dtype the next MXU feed wants.
    h = (acc_f32 + bias_f32).astype(act_dtype)
    return jnp.maximum(h, h * NEG_SLOPE)


def _make_kernel(x_feature_major, act_dtype):
    def kernel(x_ref, w1_ref, b1_ref, w2_ref, b2_ref, w3_ref, b3_ref, o_ref):
        # x_ref: (TB, D) or (D, TB).  Weights are PyTorch-layout (out, in) in
        # bf16; biases are (out, 1) f32.  Output o_ref is the transposed
        # activation (2, TB) f32 (batch lane-dense).
        xb = x_ref[...].astype(jnp.bfloat16)

        # Layer 1 -> h1ᵀ (64, TB), f32 accumulation on the MXU.
        if x_feature_major:
            acc1 = jnp.dot(w1_ref[...], xb, preferred_element_type=jnp.float32)
        else:
            acc1 = lax.dot_general(
                w1_ref[...], xb,
                dimension_numbers=(((1,), (1,)), ((), ())),
                preferred_element_type=jnp.float32)
        h1 = _bias_leaky(acc1, b1_ref[...], act_dtype)

        # Layer 2: (32, 64) @ (64, TB) -> (32, TB).
        acc2 = jnp.dot(w2_ref[...], h1.astype(jnp.bfloat16),
                       preferred_element_type=jnp.float32)
        h2 = _bias_leaky(acc2, b2_ref[...], act_dtype)

        # Layer 3: (2, 32) @ (32, TB) -> (2, TB); lane-dense store over batch.
        acc3 = jnp.dot(w3_ref[...], h2.astype(jnp.bfloat16),
                       preferred_element_type=jnp.float32)
        o_ref[...] = (acc3 + b3_ref[...]).astype(o_ref.dtype)

    return kernel


def _default_act_dtype():
    # bf16 VPU exists on v6e (Trillium) and v7x; v5e and older emulate bf16
    # elementwise ops, so keep their epilogue in f32.
    try:
        kind = jax.devices()[0].device_kind.lower()
    except Exception:
        return jnp.float32
    if "v6" in kind or "v7" in kind or "trillium" in kind:
        return jnp.bfloat16
    return jnp.float32


def _derive_tiling(B, tb_max):
    """Near-equal 128-multiple batch chunks; even step count for v7x's 2 TCs."""
    B128 = _round_up(max(B, 1), 128)
    n = max(-(-B128 // tb_max), 1)
    if n > 1 and n % 2:
        n += 1                      # even number of grid steps (megacore)
    elif n == 1 and B128 >= 2 * 128:
        n = 2                       # give the 2nd TensorCore work when free
    TB = _round_up(-(-B128 // n), 128)
    B_pad = TB * n
    return TB, n, B_pad


def net_forward(x, params, *, x_feature_major=False, max_block_batch=None,
                act_dtype=None):
    """x: (B, input_dim) (or (input_dim, B) with x_feature_major=True, for
    producers that can emit feature-major x without an extra HBM transpose).
    params: PyTorch-layout weights (out, in) and biases (out, 1).
    Returns (B, 2) float32."""
    if x_feature_major:
        D, B = x.shape
    else:
        B, D = x.shape

    if act_dtype is None:
        act_dtype = _default_act_dtype()

    # Batch-major x is lane-padded D=16 -> 128 in VMEM (8x inflation), so cap
    # its tile lower; feature-major has no padding and can go bigger.
    tb_max = max_block_batch
    if tb_max is None:
        tb_max = 32768 if x_feature_major else 16384
    tb_max = max(_round_up(tb_max, 128), 128)

    TB, n_steps, B_pad = _derive_tiling(B, tb_max)
    if B_pad != B:
        pad = B_pad - B
        x = jnp.pad(x, ((0, 0), (0, pad)) if x_feature_major else ((0, pad), (0, 0)))

    # Weights in bf16 for the MXU (f32 accumulation inside the kernel).
    w1 = params["w1"].astype(jnp.bfloat16)
    w2 = params["w2"].astype(jnp.bfloat16)
    w3 = params["w3"].astype(jnp.bfloat16)
    b1, b2, b3 = params["b1"], params["b2"], params["b3"]

    if x_feature_major:
        x_spec = pl.BlockSpec((D, TB), lambda i: (0, i))
    else:
        x_spec = pl.BlockSpec((TB, D), lambda i: (i, 0))

    def const(a):
        return pl.BlockSpec(a.shape, lambda i: (0,) * a.ndim)

    flops = 2 * B_pad * (D * 64 + 64 * 32 + 32 * 2)
    bytes_accessed = (
        B_pad * D * x.dtype.itemsize                    # x read (dominant)
        + 2 * B_pad * 4                                 # (2, B_pad) f32 write
        + sum(int(a.size) * a.dtype.itemsize
              for a in (w1, b1, w2, b2, w3, b3)))       # resident weights

    out_t = pl.pallas_call(
        _make_kernel(x_feature_major, act_dtype),
        out_shape=jax.ShapeDtypeStruct((2, B_pad), jnp.float32),
        grid=(n_steps,),
        in_specs=[
            x_spec,                                     # one batch tile / step
            const(w1), const(b1),
            const(w2), const(b2),
            const(w3), const(b3),
        ],
        out_specs=pl.BlockSpec((2, TB), lambda i: (0, i)),
        compiler_params=pltpu.CompilerParams(
            dimension_semantics=("parallel",),          # shard batch over TCs
            vmem_limit_bytes=48 * 1024 * 1024,          # <= v7x 64 MiB physical
        ),
        cost_estimate=pl.CostEstimate(
            flops=flops, transcendentals=0, bytes_accessed=bytes_accessed),
    )(x, w1, b1, w2, b2, w3, b3)

    # Back to PyTorch orientation (B, 2); drop batch padding.
    return out_t[:, :B].T


def init_params(key, input_dim):
    """PyTorch-style uniform(-1/sqrt(fan_in), 1/sqrt(fan_in)); weights stored
    in PyTorch (out_features, in_features) layout, biases as (out_features, 1)."""
    dims = [(input_dim, 64), (64, 32), (32, 2)]
    params = {}
    for i, (fan_in, fan_out) in enumerate(dims, start=1):
        key, kw, kb = jax.random.split(key, 3)
        bound = 1.0 / (fan_in ** 0.5)
        params[f"w{i}"] = jax.random.uniform(
            kw, (fan_out, fan_in), jnp.float32, minval=-bound, maxval=bound)
        params[f"b{i}"] = jax.random.uniform(
            kb, (fan_out, 1), jnp.float32, minval=-bound, maxval=bound)
    return params


def reference_forward(x, params):
    """Pure-JAX f32 reference matching the PyTorch module."""
    def lrelu(v):
        return jnp.where(v > 0, v, NEG_SLOPE * v)
    h1 = lrelu(x @ params["w1"].T + params["b1"][:, 0])
    h2 = lrelu(h1 @ params["w2"].T + params["b2"][:, 0])
    return h2 @ params["w3"].T + params["b3"][:, 0]


if __name__ == "__main__":
    key = jax.random.PRNGKey(0)
    key, kx = jax.random.split(key)

    batch, input_dim = 8, 16
    x = jax.random.normal(kx, (batch, input_dim), jnp.float32)
    params = init_params(key, input_dim)

    # Small batch: single full-extent tile.
    out = jax.block_until_ready(net_forward(x, params))
    ref = reference_forward(x, params)
    assert out.shape == (batch, 2)
    assert jnp.allclose(out, ref, atol=3e-2, rtol=3e-2), \
        float(jnp.max(jnp.abs(out - ref)))

    # Larger batch: exercises the multi-step batch grid (2 tiles) + padding.
    key, kx2 = jax.random.split(key)
    x2 = jax.random.normal(kx2, (300, input_dim), jnp.float32)
    out2 = jax.block_until_ready(net_forward(x2, params))
    ref2 = reference_forward(x2, params)
    assert out2.shape == (300, 2)
    assert jnp.allclose(out2, ref2, atol=3e-2, rtol=3e-2), \
        float(jnp.max(jnp.abs(out2 - ref2)))

    # Feature-major x path (for producers that emit (D, B) upstream).
    out3 = jax.block_until_ready(
        net_forward(x2.T, params, x_feature_major=True))
    assert out3.shape == (300, 2)
    assert jnp.allclose(out3, ref2, atol=3e-2, rtol=3e-2), \
        float(jnp.max(jnp.abs(out3 - ref2)))

    print("KERNEL_OK")
</pallas_src>

<mosaic_0001>
module attributes {stable_mosaic.version = 11 : i64} {
  func.func @kernel(%arg0: i32, %arg1: memref<128x16xf32, #tpu.memory_space<vmem>>, %arg2: memref<64x16xbf16, #tpu.memory_space<vmem>>, %arg3: memref<64x1xf32, #tpu.memory_space<vmem>>, %arg4: memref<32x64xbf16, #tpu.memory_space<vmem>>, %arg5: memref<32x1xf32, #tpu.memory_space<vmem>>, %arg6: memref<2x32xbf16, #tpu.memory_space<vmem>>, %arg7: memref<2x1xf32, #tpu.memory_space<vmem>>, %arg8: memref<2x128xf32, #tpu.memory_space<vmem>>) attributes {dimension_semantics = [#tpu.dimension_semantics<parallel>], iteration_bounds = array<i64: 1>, scalar_prefetch = 0 : i64, scratch_operands = 0 : i64, tpu.core_type = #tpu.core_type<tc>, window_params = [{transform_indices = @transform_0, window_bounds = array<i64: 128, 16>}, {pipeline_mode = #tpu.pipeline_mode<synchronous>, transform_indices = @transform_1, window_bounds = array<i64: 64, 16>}, {pipeline_mode = #tpu.pipeline_mode<synchronous>, transform_indices = @transform_2, window_bounds = array<i64: 64, 1>}, {pipeline_mode = #tpu.pipeline_mode<synchronous>, transform_indices = @transform_3, window_bounds = array<i64: 32, 64>}, {pipeline_mode = #tpu.pipeline_mode<synchronous>, transform_indices = @transform_4, window_bounds = array<i64: 32, 1>}, {pipeline_mode = #tpu.pipeline_mode<synchronous>, transform_indices = @transform_5, window_bounds = array<i64: 2, 32>}, {pipeline_mode = #tpu.pipeline_mode<synchronous>, transform_indices = @transform_6, window_bounds = array<i64: 2, 1>}, {transform_indices = @transform_7, window_bounds = array<i64: 2, 128>}]} {
    %c0 = arith.constant 0 : index
    %c0_0 = arith.constant 0 : index
    %0 = vector.load %arg1[%c0, %c0_0] : memref<128x16xf32, #tpu.memory_space<vmem>>, vector<128x16xf32>
    %1 = arith.truncf %0 : vector<128x16xf32> to vector<128x16xbf16>
    %c0_1 = arith.constant 0 : index
    %c0_2 = arith.constant 0 : index
    %2 = vector.load %arg2[%c0_1, %c0_2] : memref<64x16xbf16, #tpu.memory_space<vmem>>, vector<64x16xbf16>
    %cst = arith.constant dense<0.000000e+00> : vector<64x128xf32>
    %3 = tpu.matmul %2, %1, %cst {dimension_numbers = #tpu.dot_dimension_numbers<[1], [1], [0], [0], [0, 0, 1, 0], [], []>} : vector<64x16xbf16>, vector<128x16xbf16>, vector<64x128xf32> -> vector<64x128xf32>
    %c0_3 = arith.constant 0 : index
    %c0_4 = arith.constant 0 : index
    %4 = vector.load %arg3[%c0_3, %c0_4] : memref<64x1xf32, #tpu.memory_space<vmem>>, vector<64x1xf32>
    %5 = vector.broadcast %4 : vector<64x1xf32> to vector<64x128xf32>
    %6 = arith.addf %3, %5 : vector<64x128xf32>
    %cst_5 = arith.constant 0.00999999977 : f32
    %7 = vector.broadcast %cst_5 : f32 to vector<64x128xf32>
    %8 = arith.mulf %6, %7 : vector<64x128xf32>
    %9 = arith.maximumf %6, %8 : vector<64x128xf32>
    %c0_6 = arith.constant 0 : index
    %c0_7 = arith.constant 0 : index
    %10 = vector.load %arg4[%c0_6, %c0_7] : memref<32x64xbf16, #tpu.memory_space<vmem>>, vector<32x64xbf16>
    %11 = arith.truncf %9 : vector<64x128xf32> to vector<64x128xbf16>
    %cst_8 = arith.constant dense<0.000000e+00> : vector<32x128xf32>
    %12 = tpu.matmul %10, %11, %cst_8 {dimension_numbers = #tpu.dot_dimension_numbers<[1], [0], [0], [1], [0, 0, 1, 1], [], []>} : vector<32x64xbf16>, vector<64x128xbf16>, vector<32x128xf32> -> vector<32x128xf32>
    %c0_9 = arith.constant 0 : index
    %c0_10 = arith.constant 0 : index
    %13 = vector.load %arg5[%c0_9, %c0_10] : memref<32x1xf32, #tpu.memory_space<vmem>>, vector<32x1xf32>
    %14 = vector.broadcast %13 : vector<32x1xf32> to vector<32x128xf32>
    %15 = arith.addf %12, %14 : vector<32x128xf32>
    %cst_11 = arith.constant 0.00999999977 : f32
    %16 = vector.broadcast %cst_11 : f32 to vector<32x128xf32>
    %17 = arith.mulf %15, %16 : vector<32x128xf32>
    %18 = arith.maximumf %15, %17 : vector<32x128xf32>
    %c0_12 = arith.constant 0 : index
    %c0_13 = arith.constant 0 : index
    %19 = vector.load %arg6[%c0_12, %c0_13] : memref<2x32xbf16, #tpu.memory_space<vmem>>, vector<2x32xbf16>
    %20 = arith.truncf %18 : vector<32x128xf32> to vector<32x128xbf16>
    %cst_14 = arith.constant dense<0.000000e+00> : vector<2x128xf32>
    %21 = tpu.matmul %19, %20, %cst_14 {dimension_numbers = #tpu.dot_dimension_numbers<[1], [0], [0], [1], [0, 0, 1, 1], [], []>} : vector<2x32xbf16>, vector<32x128xbf16>, vector<2x128xf32> -> vector<2x128xf32>
    %c0_15 = arith.constant 0 : index
    %c0_16 = arith.constant 0 : index
    %22 = vector.load %arg7[%c0_15, %c0_16] : memref<2x1xf32, #tpu.memory_space<vmem>>, vector<2x1xf32>
    %23 = vector.broadcast %22 : vector<2x1xf32> to vector<2x128xf32>
    %24 = arith.addf %21, %23 : vector<2x128xf32>
    %c0_17 = arith.constant 0 : index
    %c0_18 = arith.constant 0 : index
    %25 = vector.load %arg8[%c0_17, %c0_18] : memref<2x128xf32, #tpu.memory_space<vmem>>, vector<2x128xf32>
    tpu.vector_store %arg8[%c0_17, %c0_18], %24 {strides = array<i32>} : memref<2x128xf32, #tpu.memory_space<vmem>>, vector<2x128xf32>,
    return
  }
  func.func @transform_0(%arg0: i32) -> (i32, i32) {
    %c0_i32 = arith.constant 0 : i32
    %c0_i32_0 = arith.constant 0 : i32
    return %arg0, %c0_i32 : i32, i32
  }
  func.func @transform_1(%arg0: i32) -> (i32, i32) {
    %c0_i32 = arith.constant 0 : i32
    %c0_i32_0 = arith.constant 0 : i32
    %c0_i32_1 = arith.constant 0 : i32
    return %c0_i32, %c0_i32_0 : i32, i32
  }
  func.func @transform_2(%arg0: i32) -> (i32, i32) {
    %c0_i32 = arith.constant 0 : i32
    %c0_i32_0 = arith.constant 0 : i32
    %c0_i32_1 = arith.constant 0 : i32
    return %c0_i32, %c0_i32_0 : i32, i32
  }
  func.func @transform_3(%arg0: i32) -> (i32, i32) {
    %c0_i32 = arith.constant 0 : i32
    %c0_i32_0 = arith.constant 0 : i32
    %c0_i32_1 = arith.constant 0 : i32
    return %c0_i32, %c0_i32_0 : i32, i32
  }
  func.func @transform_4(%arg0: i32) -> (i32, i32) {
    %c0_i32 = arith.constant 0 : i32
    %c0_i32_0 = arith.constant 0 : i32
    %c0_i32_1 = arith.constant 0 : i32
    return %c0_i32, %c0_i32_0 : i32, i32
  }
  func.func @transform_5(%arg0: i32) -> (i32, i32) {
    %c0_i32 = arith.constant 0 : i32
    %c0_i32_0 = arith.constant 0 : i32
    %c0_i32_1 = arith.constant 0 : i32
    return %c0_i32, %c0_i32_0 : i32, i32
  }
  func.func @transform_6(%arg0: i32) -> (i32, i32) {
    %c0_i32 = arith.constant 0 : i32
    %c0_i32_0 = arith.constant 0 : i32
    %c0_i32_1 = arith.constant 0 : i32
    return %c0_i32, %c0_i32_0 : i32, i32
  }
  func.func @transform_7(%arg0: i32) -> (i32, i32) {
    %c0_i32 = arith.constant 0 : i32
    %c0_i32_0 = arith.constant 0 : i32
    return %c0_i32, %arg0 : i32, i32
  }
}

</mosaic_0001>

<llo_original>
// kernel: tpu_custom_call.1
$region0: #{tpu_custom_call.1}
  #allocation0 [shape = 'u32[]', space=smem, size = 0x4, offset = 0x4, fixed_abs, tag = 'smem constant byte address 0x4 - core index']
  #allocation1 [shape = 'u32[144,128]{1,0:T(1,128)}', space=vmem, size = 0x12000, scoped, tag = 'internal scratch']
  %s0 = inlined_call_operand.vmem [shape: f32[128,16], index: 0, kind: input, shape index: {}]
  %s1 = inlined_call_operand.vmem [shape: bf16[64,16], index: 1, kind: input, shape index: {}]
  %s2 = inlined_call_operand.vmem [shape: f32[64,1], index: 2, kind: input, shape index: {}]
  %s3 = inlined_call_operand.vmem [shape: bf16[32,64], index: 3, kind: input, shape index: {}]
  %s4 = inlined_call_operand.vmem [shape: f32[32,1], index: 4, kind: input, shape index: {}]
  %s5 = inlined_call_operand.vmem [shape: bf16[2,32], index: 5, kind: input, shape index: {}]
  %s6 = inlined_call_operand.vmem [shape: f32[2,1], index: 6, kind: input, shape index: {}]
  %s7 = inlined_call_operand.hbm [shape: f32[2,128], index: 7, kind: output, shape index: {}]
  %s8 = sld [smem:[#allocation0]]
  $region38: #{tpu_custom_call.1} parent=0
    _
  %s10 = ssub.s32 1, %s8
  %s11 = scalar_select 0, %s10, %s8
  $region1: #{tpu_custom_call.1} parent=0
    #allocation2 [shape = 'u8[1024]{0}', space=vmem, size = 0x400, scoped, tag = 'output window, operand 0, single buffered']
    #allocation3 [shape = 's32[1]{0}', space=sflag, size = 0x4, scoped, tag = 'scoped memory for tpu_custom_call.1']
    %12 = vsyncpa [#allocation3], 0
    // Predicated region
    $region2: #{tpu_custom_call.1} parent=1 // pred_check
      _
    $region3: #{tpu_custom_call.1} parent=1 // pred_check_branch
      %14 = sbr.rel (0) target = $region5
    $region4: #{tpu_custom_call.1} parent=1 // pred_region
      _
    $region5: #{tpu_custom_call.1} parent=1 // pred_fallthru
      _
    // Predicated region
    $region6: #{tpu_custom_call.1} parent=1 // pred_check
      _
    $region7: #{tpu_custom_call.1} parent=1 // pred_check_branch
      %16 = sbr.rel (0) target = $region9
    $region8: #{tpu_custom_call.1} parent=1 // pred_region
      _
    $region9: #{tpu_custom_call.1} parent=1 // pred_fallthru
      _
    // Predicated region
    $region10: #{tpu_custom_call.1} parent=1 // pred_check
      _
    $region11: #{tpu_custom_call.1} parent=1 // pred_check_branch
      %18 = sbr.rel (0) target = $region13
    $region12: #{tpu_custom_call.1} parent=1 // pred_region
      _
    $region13: #{tpu_custom_call.1} parent=1 // pred_fallthru
      _
    // Predicated region
    $region14: #{tpu_custom_call.1} parent=1 // pred_check
      _
    $region15: #{tpu_custom_call.1} parent=1 // pred_check_branch
      %20 = sbr.rel (0) target = $region17
    $region16: #{tpu_custom_call.1} parent=1 // pred_region
      _
    $region17: #{tpu_custom_call.1} parent=1 // pred_fallthru
      _
    // Predicated region
    $region18: #{tpu_custom_call.1} parent=1 // pred_check
      _
    $region19: #{tpu_custom_call.1} parent=1 // pred_check_branch
      %22 = sbr.rel (0) target = $region21
    $region20: #{tpu_custom_call.1} parent=1 // pred_region
      _
    $region21: #{tpu_custom_call.1} parent=1 // pred_fallthru
      _
    // Predicated region
    $region22: #{tpu_custom_call.1} parent=1 // pred_check
      _
    $region23: #{tpu_custom_call.1} parent=1 // pred_check_branch
      %24 = sbr.rel (0) target = $region25
    $region24: #{tpu_custom_call.1} parent=1 // pred_region
      _
    $region25: #{tpu_custom_call.1} parent=1 // pred_fallthru
      _
    // Predicated region
    $region26: #{tpu_custom_call.1} parent=1 // pred_check
      _
    $region27: #{tpu_custom_call.1} parent=1 // pred_check_branch
      %26 = sbr.rel (0) target = $region29
    $region28: #{tpu_custom_call.1} parent=1 // pred_region
      _
    $region29: #{tpu_custom_call.1} parent=1 // pred_fallthru
      _
    %v28 = vld [vmem:[%s0] sm:$0xff]
    %v29 = vld [vmem:[%s0 + $0x8] sm:$0xff]
    %v30 = vld [vmem:[%s0 + $0x10] sm:$0xff]
    %v31 = vld [vmem:[%s0 + $0x18] sm:$0xff]
    %v32 = vld [vmem:[%s0 + $0x20] sm:$0xff]
    %v33 = vld [vmem:[%s0 + $0x28] sm:$0xff]
    %v34 = vld [vmem:[%s0 + $0x30] sm:$0xff]
    %v35 = vld [vmem:[%s0 + $0x38] sm:$0xff]
    %v36 = vld [vmem:[%s0 + $0x40] sm:$0xff]
    %v37 = vld [vmem:[%s0 + $0x48] sm:$0xff]
    %v38 = vld [vmem:[%s0 + $0x50] sm:$0xff]
    %v39 = vld [vmem:[%s0 + $0x58] sm:$0xff]
    %v40 = vld [vmem:[%s0 + $0x60] sm:$0xff]
    %v41 = vld [vmem:[%s0 + $0x68] sm:$0xff]
    %v42 = vld [vmem:[%s0 + $0x70] sm:$0xff]
    %v43 = vld [vmem:[%s0 + $0x78] sm:$0xff]
    %v44 = vpack.c.bf16 %v29, %v28
    %v45 = vpack.c.bf16 %v31, %v30
    %v46 = vpack.c.bf16 %v33, %v32
    %v47 = vpack.c.bf16 %v35, %v34
    %v48 = vpack.c.bf16 %v37, %v36
    %v49 = vpack.c.bf16 %v39, %v38
    %v50 = vpack.c.bf16 %v41, %v40
    %v51 = vpack.c.bf16 %v43, %v42
    %v52 = vld [vmem:[%s1] sm:$0xf]
    %v53 = vld [vmem:[%s1 + $0x4] sm:$0xf]
    %v54 = vld [vmem:[%s1 + $0x8] sm:$0xf]
    %v55 = vld [vmem:[%s1 + $0xc] sm:$0xf]
    %v56 = vld [vmem:[%s1 + $0x10] sm:$0xf]
    %v57 = vld [vmem:[%s1 + $0x14] sm:$0xf]
    %v58 = vld [vmem:[%s1 + $0x18] sm:$0xf]
    %v59 = vld [vmem:[%s1 + $0x1c] sm:$0xf]
    %v60 = vld [vmem:[%s2] sm:$0xff]
    %v61 = vld [vmem:[%s2 + $0x8] sm:$0xff]
    %v62 = vld [vmem:[%s2 + $0x10] sm:$0xff]
    %v63 = vld [vmem:[%s2 + $0x18] sm:$0xff]
    %v64 = vld [vmem:[%s2 + $0x20] sm:$0xff]
    %v65 = vld [vmem:[%s2 + $0x28] sm:$0xff]
    %v66 = vld [vmem:[%s2 + $0x30] sm:$0xff]
    %v67 = vld [vmem:[%s2 + $0x38] sm:$0xff]
    %69 = vset.pattern.permute.xlu0 0
    %70 = vperm.xlu0 %69, %v60
    %v71 = vpop.permute.xlu0 %70
    %74 = vset.pattern.permute.xlu0 0
    %75 = vperm.xlu0 %74, %v61
    %v76 = vpop.permute.xlu0 %75
    %79 = vset.pattern.permute.xlu0 0
    %80 = vperm.xlu0 %79, %v62
    %v81 = vpop.permute.xlu0 %80
    %84 = vset.pattern.permute.xlu0 0
    %85 = vperm.xlu0 %84, %v63
    %v86 = vpop.permute.xlu0 %85
    %89 = vset.pattern.permute.xlu0 0
    %90 = vperm.xlu0 %89, %v64
    %v91 = vpop.permute.xlu0 %90
    %94 = vset.pattern.permute.xlu0 0
    %95 = vperm.xlu0 %94, %v65
    %v96 = vpop.permute.xlu0 %95
    %99 = vset.pattern.permute.xlu0 0
    %100 = vperm.xlu0 %99, %v66
    %v101 = vpop.permute.xlu0 %100
    %104 = vset.pattern.permute.xlu0 0
    %105 = vperm.xlu0 %104, %v67
    %v106 = vpop.permute.xlu0 %105
    %v116 = vunpack.c.l.b16 %v52
    %v117 = vunpack.c.l.b16 %v53
    %v118 = vunpack.c.l.b16 %v54
    %v119 = vunpack.c.l.b16 %v55
    %v120 = vunpack.c.l.b16 %v56
    %v121 = vunpack.c.l.b16 %v57
    %v122 = vunpack.c.l.b16 %v58
    %v123 = vunpack.c.l.b16 %v59
    %v124 = vpack.c.b16 %v117, %v116
    %v125 = vpack.c.b16 %v119, %v118
    %v126 = vpack.c.b16 %v121, %v120
    %v127 = vpack.c.b16 %v123, %v122
    %vm128 = vcmask 130048
    %v130 = vsel %vm128, %v124, 0
    %v133 = vsel %vm128, %v125, 0
    %v136 = vsel %vm128, %v126, 0
    %v139 = vsel %vm128, %v127, 0
    %v142 = vsel %vm128, %v44, 0
    %v145 = vsel %vm128, %v45, 0
    %v148 = vsel %vm128, %v46, 0
    %v151 = vsel %vm128, %v47, 0
    %v154 = vsel %vm128, %v48, 0
    %v157 = vsel %vm128, %v49, 0
    %v160 = vsel %vm128, %v50, 0
    %v163 = vsel %vm128, %v51, 0
    %165 = vmatprep.subr.bf16.mxu0 0
    %166 = vmatpush1.bf16.xpose.msra.mxu0 %v163
    %167 = vmatprep.subr.bf16.mxu0 0
    %168 = vmatpush1.bf16.xpose.msra.mxu0 %v160
    %169 = vmatprep.subr.bf16.mxu0 0
    %170 = vmatpush1.bf16.xpose.msra.mxu0 %v157
    %171 = vmatprep.subr.bf16.mxu0 0
    %172 = vmatpush1.bf16.xpose.msra.mxu0 %v154
    %173 = vmatprep.subr.bf16.mxu0 0
    %174 = vmatpush1.bf16.xpose.msra.mxu0 %v151
    %175 = vmatprep.subr.bf16.mxu0 0
    %176 = vmatpush1.bf16.xpose.msra.mxu0 %v148
    %177 = vmatprep.subr.bf16.mxu0 0
    %178 = vmatpush1.bf16.xpose.msra.mxu0 %v145
    %179 = vmatprep.subr.bf16.mxu0 0
    %180 = vmatpush1.bf16.xpose.msra.mxu0 %v142
    %181 = vmatprep.subr.bf16.mxu0 0
    %182 = vmatpush2.bf16.xpose.msra.mxu0 0
    %183 = vmatprep.subr.bf16.mxu0 0
    %184 = vmatpush2.bf16.xpose.msra.mxu0 0
    %185 = vmatprep.subr.bf16.mxu0 0
    %186 = vmatpush2.bf16.xpose.msra.mxu0 0
    %187 = vmatprep.subr.bf16.mxu0 0
    %188 = vmatpush2.bf16.xpose.msra.mxu0 0
    %189 = vmatprep.subr.bf16.mxu0 0
    %190 = vmatpush2.bf16.xpose.msra.mxu0 0
    %191 = vmatprep.subr.bf16.mxu0 0
    %192 = vmatpush2.bf16.xpose.msra.mxu0 0
    %193 = vmatprep.subr.bf16.mxu0 0
    %194 = vmatpush2.bf16.xpose.msra.mxu0 0
    %195 = vmatprep.subr.bf16.mxu0 0
    %196 = vmatpush2.bf16.xpose.msra.mxu0 0
    %197 = vmatprep.mubr.bf16.mxu0 0
    %198 = vmatmul.mubr.bf16.gmra.mxu0 %v130
    %v199 = vpop.f32.mrf.mxu0
    %v200 = vadd.f32 %v71, %v199
    %v201 = vpop.f32.mrf.mxu0
    %v202 = vpop.f32.mrf.mxu0
    %v203 = vadd.f32 %v76, %v202
    %v204 = vpop.f32.mrf.mxu0
    %205 = vmatprep.mubr.bf16.mxu0 0
    %206 = vmatmul.mubr.bf16.gmra.mxu0 %v133
    %v207 = vpop.f32.mrf.mxu0
    %v208 = vadd.f32 %v81, %v207
    %v209 = vpop.f32.mrf.mxu0
    %v210 = vpop.f32.mrf.mxu0
    %v211 = vadd.f32 %v86, %v210
    %v212 = vpop.f32.mrf.mxu0
    %213 = vmatprep.mubr.bf16.mxu0 0
    %214 = vmatmul.mubr.bf16.gmra.mxu0 %v136
    %v215 = vpop.f32.mrf.mxu0
    %v216 = vadd.f32 %v91, %v215
    %v217 = vpop.f32.mrf.mxu0
    %v218 = vpop.f32.mrf.mxu0
    %v219 = vadd.f32 %v96, %v218
    %v220 = vpop.f32.mrf.mxu0
    %221 = vmatprep.mubr.bf16.mxu0 0
    %222 = vmatmul.mubr.bf16.gmra.mxu0 %v139
    %v223 = vpop.f32.mrf.mxu0
    %v224 = vadd.f32 %v101, %v223
    %v225 = vpop.f32.mrf.mxu0
    %v226 = vpop.f32.mrf.mxu0
    %v227 = vadd.f32 %v106, %v226
    %v228 = vpop.f32.mrf.mxu0
    %229 = vdwg.mxu0
    %v230 = vmul.f32 %v200, 0.01
    %v231 = vmul.f32 %v203, 0.01
    %v232 = vmul.f32 %v208, 0.01
    %v233 = vmul.f32 %v211, 0.01
    %v234 = vmul.f32 %v216, 0.01
    %v235 = vmul.f32 %v219, 0.01
    %v236 = vmul.f32 %v224, 0.01
    %v237 = vmul.f32 %v227, 0.01
    %v238 = vmax.f32 %v200, %v230
    %v239 = vmax.f32 %v203, %v231
    %v240 = vmax.f32 %v208, %v232
    %v241 = vmax.f32 %v211, %v233
    %v242 = vmax.f32 %v216, %v234
    %v243 = vmax.f32 %v219, %v235
    %v244 = vmax.f32 %v224, %v236
    %v245 = vmax.f32 %v227, %v237
    %v246 = vld [vmem:[%s3] sm:$0xf]
    %v247 = vld [vmem:[%s3 + $0x4] sm:$0xf]
    %v248 = vld [vmem:[%s3 + $0x8] sm:$0xf]
    %v249 = vld [vmem:[%s3 + $0xc] sm:$0xf]
    %v250 = vpack.c.bf16 %v239, %v238
    %v251 = vpack.c.bf16 %v241, %v240
    %v252 = vpack.c.bf16 %v243, %v242
    %v253 = vpack.c.bf16 %v245, %v244
    %v254 = vld [vmem:[%s4] sm:$0xff]
    %v255 = vld [vmem:[%s4 + $0x8] sm:$0xff]
    %v256 = vld [vmem:[%s4 + $0x10] sm:$0xff]
    %v257 = vld [vmem:[%s4 + $0x18] sm:$0xff]
    %259 = vset.pattern.permute.xlu0 0
    %260 = vperm.xlu0 %259, %v254
    %v261 = vpop.permute.xlu0 %260
    %264 = vset.pattern.permute.xlu0 0
    %265 = vperm.xlu0 %264, %v255
    %v266 = vpop.permute.xlu0 %265
    %269 = vset.pattern.permute.xlu0 0
    %270 = vperm.xlu0 %269, %v256
    %v271 = vpop.permute.xlu0 %270
    %274 = vset.pattern.permute.xlu0 0
    %275 = vperm.xlu0 %274, %v257
    %v276 = vpop.permute.xlu0 %275
    %v282 = vunpack.c.l.b16 %v246
    %v283 = vunpack.c.l.b16 %v247
    %v284 = vunpack.c.l.b16 %v248
    %v285 = vunpack.c.l.b16 %v249
    %v286 = vpack.c.b16 %v283, %v282
    %v287 = vpack.c.b16 %v285, %v284
    %vm288 = vcmask 523264
    %v290 = vsel %vm288, %v286, 0
    %v293 = vsel %vm288, %v287, 0
    %295 = vmatprep.subr.bf16.mxu0 0
    %296 = vmatpush1.bf16.msra.mxu0 0
    %297 = vmatprep.subr.bf16.mxu0 0
    %298 = vmatpush1.bf16.msra.mxu0 0
    %299 = vmatprep.subr.bf16.mxu0 0
    %300 = vmatpush1.bf16.msra.mxu0 0
    %301 = vmatprep.subr.bf16.mxu0 0
    %302 = vmatpush1.bf16.msra.mxu0 0
    %303 = vmatprep.subr.bf16.mxu0 0
    %304 = vmatpush1.bf16.msra.mxu0 %v253
    %305 = vmatprep.subr.bf16.mxu0 0
    %306 = vmatpush1.bf16.msra.mxu0 %v252
    %307 = vmatprep.subr.bf16.mxu0 0
    %308 = vmatpush1.bf16.msra.mxu0 %v251
    %309 = vmatprep.subr.bf16.mxu0 0
    %310 = vmatpush1.bf16.msra.mxu0 %v250
    %311 = vmatprep.subr.bf16.mxu0 0
    %312 = vmatpush2.bf16.msra.mxu0 0
    %313 = vmatprep.subr.bf16.mxu0 0
    %314 = vmatpush2.bf16.msra.mxu0 0
    %315 = vmatprep.subr.bf16.mxu0 0
    %316 = vmatpush2.bf16.msra.mxu0 0
    %317 = vmatprep.subr.bf16.mxu0 0
    %318 = vmatpush2.bf16.msra.mxu0 0
    %319 = vmatprep.subr.bf16.mxu0 0
    %320 = vmatpush2.bf16.msra.mxu0 0
    %321 = vmatprep.subr.bf16.mxu0 0
    %322 = vmatpush2.bf16.msra.mxu0 0
    %323 = vmatprep.subr.bf16.mxu0 0
    %324 = vmatpush2.bf16.msra.mxu0 0
    %325 = vmatprep.subr.bf16.mxu0 0
    %326 = vmatpush2.bf16.msra.mxu0 0
    %327 = vmatprep.mubr.bf16.mxu0 0
    %328 = vmatmul.mubr.bf16.gmra.mxu0 %v290
    %v329 = vpop.f32.mrf.mxu0
    %v330 = vadd.f32 %v261, %v329
    %v331 = vpop.f32.mrf.mxu0
    %v332 = vpop.f32.mrf.mxu0
    %v333 = vadd.f32 %v266, %v332
    %v334 = vpop.f32.mrf.mxu0
    %335 = vmatprep.mubr.bf16.mxu0 0
    %336 = vmatmul.mubr.bf16.gmra.mxu0 %v293
    %v337 = vpop.f32.mrf.mxu0
    %v338 = vadd.f32 %v271, %v337
    %v339 = vpop.f32.mrf.mxu0
    %v340 = vpop.f32.mrf.mxu0
    %v341 = vadd.f32 %v276, %v340
    %v342 = vpop.f32.mrf.mxu0
    %343 = vdwg.mxu0
    %v344 = vmul.f32 %v330, 0.01
    %v345 = vmul.f32 %v333, 0.01
    %v346 = vmul.f32 %v338, 0.01
    %v347 = vmul.f32 %v341, 0.01
    %v348 = vmax.f32 %v330, %v344
    %v349 = vmax.f32 %v333, %v345
    %v350 = vmax.f32 %v338, %v346
    %v351 = vmax.f32 %v341, %v347
    %v352 = vld [vmem:[%s5] sm:$0x1]
    %v353 = vpack.c.bf16 %v349, %v348
    %v354 = vpack.c.bf16 %v351, %v350
    %v355 = vld [vmem:[%s6] sm:$0x3]
    %357 = vset.pattern.permute.xlu0 0
    %358 = vperm.xlu0 %357, %v355
    %v359 = vpop.permute.xlu0 %358
    %vm361 = vcmask 261120
    %v363 = vsel %vm361, %v352, 0
    %365 = vmatprep.subr.bf16.mxu0 0
    %366 = vmatpush1.bf16.msra.mxu0 0
    %367 = vmatprep.subr.bf16.mxu0 0
    %368 = vmatpush1.bf16.msra.mxu0 0
    %369 = vmatprep.subr.bf16.mxu0 0
    %370 = vmatpush1.bf16.msra.mxu0 0
    %371 = vmatprep.subr.bf16.mxu0 0
    %372 = vmatpush1.bf16.msra.mxu0 0
    %373 = vmatprep.subr.bf16.mxu0 0
    %374 = vmatpush1.bf16.msra.mxu0 0
    %375 = vmatprep.subr.bf16.mxu0 0
    %376 = vmatpush1.bf16.msra.mxu0 0
    %377 = vmatprep.subr.bf16.mxu0 0
    %378 = vmatpush1.bf16.msra.mxu0 %v354
    %379 = vmatprep.subr.bf16.mxu0 0
    %380 = vmatpush1.bf16.msra.mxu0 %v353
    %381 = vmatprep.subr.bf16.mxu0 0
    %382 = vmatpush2.bf16.msra.mxu0 0
    %383 = vmatprep.subr.bf16.mxu0 0
    %384 = vmatpush2.bf16.msra.mxu0 0
    %385 = vmatprep.subr.bf16.mxu0 0
    %386 = vmatpush2.bf16.msra.mxu0 0
    %387 = vmatprep.subr.bf16.mxu0 0
    %388 = vmatpush2.bf16.msra.mxu0 0
    %389 = vmatprep.subr.bf16.mxu0 0
    %390 = vmatpush2.bf16.msra.mxu0 0
    %391 = vmatprep.subr.bf16.mxu0 0
    %392 = vmatpush2.bf16.msra.mxu0 0
    %393 = vmatprep.subr.bf16.mxu0 0
    %394 = vmatpush2.bf16.msra.mxu0 0
    %395 = vmatprep.subr.bf16.mxu0 0
    %396 = vmatpush2.bf16.msra.mxu0 0
    %397 = vmatprep.mubr.bf16.mxu0 0
    %398 = vmatmul.mubr.bf16.gmra.mxu0 %v363
    %v399 = vpop.f32.mrf.mxu0
    %v400 = vadd.f32 %v359, %v399
    %v401 = vpop.f32.mrf.mxu0
    %v402 = vpop.f32.mrf.mxu0
    %v403 = vpop.f32.mrf.mxu0
    %404 = vdwg.mxu0
    %405 = vst [vmem:[#allocation2] sm:$0x3] %v400
    // Predicated region
    $region30: #{tpu_custom_call.1} parent=1 // pred_check
      _
    $region31: #{tpu_custom_call.1} parent=1 // pred_check_branch
      %407 = sbr.rel (0) target = $region33
    $region32: #{tpu_custom_call.1} parent=1 // pred_region
      %s409 = ssub.s32 32, 32
      %410 = vsyncadd [#allocation3], %s409
      %s412 = sshll.u32 [#allocation2], 4
      %s413 = int_to_ptr.vmem [resolvable:$true] %s412
      %415 = dma.vmem_to_hbm [thread:$0]  %s413, 32, %s7, [#allocation3]
    $region33: #{tpu_custom_call.1} parent=1 // pred_fallthru
      _
    // Predicated region
    $region34: #{tpu_custom_call.1} parent=1 // pred_check
      _
    $region35: #{tpu_custom_call.1} parent=1 // pred_check_branch
      %417 = sbr.rel (0) target = $region37
    $region36: #{tpu_custom_call.1} parent=1 // pred_region
      %418 = dma.done [#allocation3], 32
    $region37: #{tpu_custom_call.1} parent=1 // pred_fallthru
      _
    %419 = vsyncpa [#allocation3], 1

</llo_original>
